<compile_context>
chip_gen: v6e
topology: v6e:2x2x1
jax: 0.10.0
libtpu: 0.0.40
codegen_flags: <defaults>
</compile_context>

<pallas_src>
import functools

import jax
import jax.numpy as jnp
from jax import lax
from jax.experimental import pallas as pl
from jax.experimental.pallas import tpu as pltpu


_QUEUE_TILE_TARGET = 9600          # 5 pipeline steps for the real K=48000
_QUEUE_VMEM_BUDGET = 24 << 20      # double-buffered queue-tile byte budget (v7x-safe)


def _pick_queue_tile(K, D, itemsize, target=_QUEUE_TILE_TARGET):
    """Largest divisor of K <= target that is a multiple of 128 (lane-dense
    stores, sublane-aligned tiles) and whose double-buffered (tk, D) tile fits
    the VMEM budget.  D-aware so large feature dims don't blow v7x VMEM."""
    max_tk = max(128, _QUEUE_VMEM_BUDGET // (2 * D * itemsize))
    target = int(min(target, max_tk))
    if K <= target:
        return K
    for d in range(min(target, K), 127, -1):
        if K % d == 0 and d % 128 == 0:
            return d
    return K


def _vmem_limit_bytes(nbytes):
    """Requested buffers + headroom, clamped to [16 MiB, 64 MiB]."""
    return int(min(max(nbytes + (4 << 20), 16 << 20), 64 << 20))


# ---------------------------------------------------------------------------
# Pallas kernel 1: per-superclass masked sum over the memory queue
#   sums[c, :] = sum_k [labels[k]==c] * valid[k] * queue[k, :]
# Counts are computed outside the kernel from (labels, valid); the queue tile
# goes VMEM -> MXU untouched (bf16), the masked one-hot is cheap VPU filler.
# ---------------------------------------------------------------------------
def _class_mean_kernel(labels_ref, valid_ref, queue_ref, sums_ref):
    C = sums_ref.shape[1]
    labels = labels_ref[...]                                  # (1, TK) int32
    valid = valid_ref[...]                                    # (1, TK) f32
    classes = lax.broadcasted_iota(jnp.int32, (C, 1), 0)      # (C, 1)
    oh = jnp.where(labels == classes, valid, 0.0)             # (C, TK) masked one-hot
    oh = oh.astype(queue_ref.dtype)                           # exact 0/1 in bf16
    # Canonical NN matmul (contract lhs dim 1 with rhs dim 0) -> MXU, no .T.
    sums_ref[...] = lax.dot_general(
        oh, queue_ref[...],
        dimension_numbers=(((1,), (0,)), ((), ())),
        preferred_element_type=jnp.float32)[None]             # (1, C, D) partial slab


def class_mean_features_pallas(queue, queue_labels, queue_valid, num_superclass,
                               *, tk=None):
    """Returns [num_superclass, dim] mean of valid (non-zero) queue rows per
    class.  Empty classes give NaN (matches torch.mean over an empty slice)."""
    K, D = queue.shape
    q_item = jnp.dtype(queue.dtype).itemsize
    tk = tk if tk is not None else _pick_queue_tile(K, D, q_item)
    assert K % tk == 0
    num_tiles = K // tk

    labels2d = queue_labels.astype(jnp.int32).reshape(1, K)   # tiny side inputs
    valid2d = queue_valid.astype(jnp.float32).reshape(1, K)

    vmem = _vmem_limit_bytes(2 * tk * D * q_item          # queue tile, 2-buffered
                             + 2 * tk * 8                 # labels + valid tiles
                             + 2 * num_superclass * D * 4)  # output slab

    sums = pl.pallas_call(
        _class_mean_kernel,
        out_shape=jax.ShapeDtypeStruct((num_tiles, num_superclass, D), jnp.float32),
        grid_spec=pltpu.PrefetchScalarGridSpec(
            num_scalar_prefetch=0,
            grid=(num_tiles,),
            in_specs=[
                pl.BlockSpec((1, tk), lambda k: (0, k)),        # labels tile
                pl.BlockSpec((1, tk), lambda k: (0, k)),        # valid tile
                pl.BlockSpec((tk, D), lambda k: (k, 0)),        # queue tile (bf16)
            ],
            out_specs=pl.BlockSpec((1, num_superclass, D), lambda k: (k, 0, 0)),
        ),
        compiler_params=pltpu.CompilerParams(
            dimension_semantics=("parallel",),   # independent slabs -> v7x 2-TC OK
            vmem_limit_bytes=vmem),
    )(labels2d, valid2d, queue)

    total_sums = jnp.sum(sums, axis=0)                         # (C, D)
    # Counts are O(K) scalar work -> keep out of the streamed kernel entirely.
    counts = jnp.zeros((num_superclass,), jnp.float32
                       ).at[queue_labels].add(queue_valid.astype(jnp.float32))
    return total_sums / counts[:, None]                        # NaN where class empty


# ---------------------------------------------------------------------------
# Pallas kernel 2 (sim_module hot path): fused cosine similarity
#   sim = normalize(targets) @ queue^T * cached_inv_norm
# Targets pre-normalized once in the wrapper; queue row norms are cached in the
# state (updated only for the B rows overwritten at enqueue), so the bf16 queue
# tile goes VMEM -> MXU untouched and the scale is a cheap (Bt, tk) VPU mul.
# ---------------------------------------------------------------------------
def _cosine_sim_kernel(tgt_ref, queue_ref, invn_ref, out_ref):
    s = lax.dot_general(
        tgt_ref[...], queue_ref[...],
        dimension_numbers=(((1,), (1,)), ((), ())),            # contract D, no .T
        preferred_element_type=jnp.float32)                    # (Bt, TK) f32
    out_ref[...] = s * invn_ref[...]                           # column scale 1/||q||


def cosine_similarity_pallas(target_features, queue, queue_invnorm, *, tk=None):
    """[Bt, K] cosine similarities; queue streamed once in large lane-dense tiles."""
    Bt, D = target_features.shape
    K, D2 = queue.shape
    assert D == D2
    q_item = jnp.dtype(queue.dtype).itemsize
    tk = tk if tk is not None else _pick_queue_tile(K, D, q_item)
    assert K % tk == 0

    t = target_features.astype(jnp.float32)
    t_n = (t * lax.rsqrt(jnp.sum(t * t, axis=-1, keepdims=True) + 1e-12)
           ).astype(queue.dtype)                               # bf16 MXU path
    invn2d = queue_invnorm.astype(jnp.float32).reshape(1, K)

    vmem = _vmem_limit_bytes(2 * tk * D * q_item + 2 * tk * 4
                             + 2 * Bt * D * q_item + 2 * Bt * tk * 4)

    return pl.pallas_call(
        _cosine_sim_kernel,
        out_shape=jax.ShapeDtypeStruct((Bt, K), jnp.float32),
        grid_spec=pltpu.PrefetchScalarGridSpec(
            num_scalar_prefetch=0,
            grid=(K // tk,),
            in_specs=[
                pl.BlockSpec((Bt, D), lambda k: (0, 0)),       # targets resident
                pl.BlockSpec((tk, D), lambda k: (k, 0)),       # queue tile (bf16)
                pl.BlockSpec((1, tk), lambda k: (0, k)),       # cached inverse norms
            ],
            out_specs=pl.BlockSpec((Bt, tk), lambda k: (0, k)),
        ),
        compiler_params=pltpu.CompilerParams(
            dimension_semantics=("parallel",),
            vmem_limit_bytes=vmem),
    )(t_n, queue, invn2d)


# ---------------------------------------------------------------------------
# MSC similarity loss (cl.MSCLoss is an external dependency; approximated with
# the documented config: cosine sim, tau, top_ranked_n ranking pool, kNN vote).
# NOTE: MemoryModule_rsf.forward itself never calls sim_module; kept & optimized
# for completeness.
# TODO(synk): exact cl.MSCLoss internals (ranking_k handling) unavailable.
# ---------------------------------------------------------------------------
def msc_loss(queue, queue_labels, queue_invnorm, target_features, target_features_0,
             target_labels, *, tau, top_n_sim, top_ranked_n, num_classes, tk=None):
    Bt = target_features.shape[0]
    # Fuse both views into ONE pallas_call: queue streamed from HBM once.
    both = jnp.concatenate([target_features, target_features_0], axis=0)   # (2Bt, D)
    sims_both = cosine_similarity_pallas(both, queue, queue_invnorm, tk=tk)  # (2Bt, K)

    def one_view(sims):
        top_sim, top_idx = lax.top_k(sims, top_ranked_n)        # single full-K top_k
        top_lab = queue_labels[top_idx]                         # (Bt, top_ranked_n)
        w = jax.nn.softmax(top_sim / tau, axis=-1)
        onehot = jax.nn.one_hot(top_lab, num_classes, dtype=jnp.float32)
        class_prob = jnp.einsum("bn,bnc->bc", w, onehot)        # (Bt, C)
        nll = -jnp.log(class_prob[jnp.arange(Bt), target_labels] + 1e-12)
        loss = jnp.mean(nll)
        # kNN prediction reuses the already-sorted ranking pool (knn <= top_ranked_n)
        knn_lab = top_lab[:, :top_n_sim]
        votes = jnp.sum(jax.nn.one_hot(knn_lab, num_classes, dtype=jnp.float32), axis=1)
        pred = jnp.argmax(votes, axis=-1)
        correct = jnp.sum((pred == target_labels).astype(jnp.int32))
        return loss, correct

    loss1, correct1 = one_view(sims_both[:Bt])
    loss0, _ = one_view(sims_both[Bt:])
    return 0.5 * (loss1 + loss0), correct1


# ---------------------------------------------------------------------------
# MemoryModule_rsf forward
# state = (queue, queue_labels, queue_valid, queue_invnorm, queue_ptr)
# ---------------------------------------------------------------------------
def init_memory_state(K, dim, queue_dtype=jnp.bfloat16):
    # queue stored bf16 per perf review (use jnp.float32 for bit-exact torch parity)
    queue = jnp.zeros((K, dim), queue_dtype)
    queue_labels = jnp.zeros((K,), jnp.int32)
    queue_valid = jnp.zeros((K,), jnp.float32)     # 1.0 for enqueued non-zero rows
    queue_invnorm = jnp.zeros((K,), jnp.float32)   # cached 1/||row|| for cosine path
    queue_ptr = jnp.zeros((1,), jnp.int32)
    return queue, queue_labels, queue_valid, queue_invnorm, queue_ptr


def memory_module_rsf_forward(state, features, source_labels, *,
                              num_superclass, tk=None):
    queue, queue_labels, queue_valid, queue_invnorm, queue_ptr = state
    K = queue.shape[0]
    B = features.shape[0]
    assert K % B == 0                       # spec: assert self.K % batch_size == 0

    # _dequeue_and_enqueue (in place when the state is donated to jit)
    ptr = queue_ptr[0]
    feats_q = features.astype(queue.dtype)
    queue = lax.dynamic_update_slice(queue, feats_q, (ptr, 0))
    queue_labels = lax.dynamic_update_slice(
        queue_labels, source_labels.astype(queue_labels.dtype), (ptr,))
    f32 = feats_q.astype(jnp.float32)
    # validity of the newly written rows (sum!=0 proxy for torch's mean!=0 test)
    new_valid = (jnp.sum(f32, axis=-1) != 0.0).astype(jnp.float32)
    queue_valid = lax.dynamic_update_slice(queue_valid, new_valid, (ptr,))
    # refresh cached inverse norms only for the B overwritten rows
    new_inv = lax.rsqrt(jnp.sum(f32 * f32, axis=-1) + 1e-12)
    queue_invnorm = lax.dynamic_update_slice(queue_invnorm, new_inv, (ptr,))
    new_ptr = jnp.reshape((ptr + B) % K, (1,)).astype(jnp.int32)

    # per-superclass mean over valid queue rows (single streamed Pallas pass)
    mean_feature = class_mean_features_pallas(
        queue, queue_labels, queue_valid, num_superclass, tk=tk)  # (C, dim)

    new_state = (queue, queue_labels, queue_valid, queue_invnorm, new_ptr)
    return mean_feature, new_state


# ---------------------------------------------------------------------------
if __name__ == "__main__":
    DIM = 128            # feature dimension (module default)
    K = 1024             # memory queue size (small stand-in for 48000)
    B = 16               # batch enqueued per forward
    NUM_SUPERCLASS = 4
    TAU = 0.007
    TK_DEMO = 256        # small tile to exercise the multi-tile grid path

    key = jax.random.PRNGKey(0)
    k1, k2, k3 = jax.random.split(key, 3)

    features = jax.random.normal(k1, (B, DIM), jnp.float32)
    # every superclass present so no empty-class NaN (torch would NaN identically)
    source_labels = (jnp.arange(B) % NUM_SUPERCLASS).astype(jnp.int32)

    state = init_memory_state(K, DIM)

    fwd = jax.jit(
        functools.partial(memory_module_rsf_forward,
                          num_superclass=NUM_SUPERCLASS, tk=TK_DEMO),
        donate_argnums=(0,))   # in-place enqueue: no full-queue copy per step

    mean_feature, new_state = fwd(state, features, source_labels)
    jax.block_until_ready((mean_feature, new_state))
    assert mean_feature.shape == (NUM_SUPERCLASS, DIM)
    assert bool(jnp.all(jnp.isfinite(mean_feature)))

    # Pure-JAX reference check of the Pallas class-mean (same bf16 queue values).
    q32 = new_state[0].astype(jnp.float32)
    lbl, val = new_state[1], new_state[2]
    ref_rows = []
    for c in range(NUM_SUPERCLASS):
        m = ((lbl == c) & (val > 0)).astype(jnp.float32)
        ref_rows.append(jnp.sum(q32 * m[:, None], axis=0) / jnp.sum(m))
    ref = jnp.stack(ref_rows)
    assert bool(jnp.allclose(mean_feature, ref, rtol=1e-3, atol=1e-3))

    # Exercise the optimized sim_module (MSC) path as well.
    tgt = jax.random.normal(k2, (8, DIM), jnp.float32)
    tgt0 = jax.random.normal(k3, (8, DIM), jnp.float32)
    tgt_labels = (jnp.arange(8) % NUM_SUPERCLASS).astype(jnp.int32)
    msc = jax.jit(functools.partial(
        msc_loss, tau=TAU, top_n_sim=5, top_ranked_n=32,
        num_classes=NUM_SUPERCLASS, tk=TK_DEMO))
    loss, correct = msc(new_state[0], new_state[1], new_state[3],
                        tgt, tgt0, tgt_labels)
    jax.block_until_ready((loss, correct))
    assert jnp.isfinite(loss)

    print("KERNEL_OK")
</pallas_src>

<mosaic_0001>
module attributes {stable_mosaic.version = 11 : i64} {
  func.func private @main(%arg0: i32) attributes {dimension_semantics = [#tpu.dimension_semantics<core_parallel>], iteration_bounds = array<i64: 2>, tpu.core_type = #tpu.core_type<sc_scalar_subcore>, window_params = []} {
    return
  }
}

module attributes {stable_mosaic.version = 11 : i64} {
  func.func private @main(%arg0: i32) attributes {dimension_semantics = [#tpu.dimension_semantics<core_parallel>], iteration_bounds = array<i64: 2>, tpu.core_type = #tpu.core_type<sc_scalar_subcore>, window_params = []} {
    return
  }
}

module attributes {stable_mosaic.version = 11 : i64} {
  func.func @_class_mean_kernel(%arg0: i32, %arg1: memref<1x256xi32, #tpu.memory_space<vmem>>, %arg2: memref<1x256xf32, #tpu.memory_space<vmem>>, %arg3: memref<256x128xbf16, #tpu.memory_space<vmem>>, %arg4: memref<1x4x128xf32, #tpu.memory_space<vmem>>) attributes {dimension_semantics = [#tpu.dimension_semantics<parallel>], iteration_bounds = array<i64: 4>, scalar_prefetch = 0 : i64, scratch_operands = 0 : i64, tpu.core_type = #tpu.core_type<tc>, window_params = [{transform_indices = @transform_0, window_bounds = array<i64: 1, 256>}, {transform_indices = @transform_1, window_bounds = array<i64: 1, 256>}, {transform_indices = @transform_2, window_bounds = array<i64: 256, 128>}, {transform_indices = @transform_3, window_bounds = array<i64: 1, 4, 128>}]} {
    %c0 = arith.constant 0 : index
    %c0_0 = arith.constant 0 : index
    %0 = vector.load %arg1[%c0, %c0_0] : memref<1x256xi32, #tpu.memory_space<vmem>>, vector<1x256xi32>
    %c0_1 = arith.constant 0 : index
    %c0_2 = arith.constant 0 : index
    %1 = vector.load %arg2[%c0_1, %c0_2] : memref<1x256xf32, #tpu.memory_space<vmem>>, vector<1x256xf32>
    %2 = tpu.iota {dimensions = array<i32: 0>} : vector<4x1xi32>
    %3 = vector.broadcast %0 : vector<1x256xi32> to vector<4x256xi32>
    %4 = vector.broadcast %2 : vector<4x1xi32> to vector<4x256xi32>
    %5 = arith.cmpi eq, %3, %4 : vector<4x256xi32>
    %cst = arith.constant 0.000000e+00 : f32
    %6 = vector.shape_cast %1 : vector<1x256xf32> to vector<1x256xf32>
    %7 = vector.broadcast %6 : vector<1x256xf32> to vector<4x256xf32>
    %8 = vector.broadcast %cst : f32 to vector<4x256xf32>
    %9 = arith.select %5, %7, %8 : vector<4x256xi1>, vector<4x256xf32>
    %10 = arith.truncf %9 : vector<4x256xf32> to vector<4x256xbf16>
    %c0_3 = arith.constant 0 : index
    %c0_4 = arith.constant 0 : index
    %11 = vector.load %arg3[%c0_3, %c0_4] : memref<256x128xbf16, #tpu.memory_space<vmem>>, vector<256x128xbf16>
    %cst_5 = arith.constant dense<0.000000e+00> : vector<4x128xf32>
    %12 = tpu.matmul %10, %11, %cst_5 {dimension_numbers = #tpu.dot_dimension_numbers<[1], [0], [0], [1], [0, 0, 1, 1], [], []>} : vector<4x256xbf16>, vector<256x128xbf16>, vector<4x128xf32> -> vector<4x128xf32>
    %13 = vector.shape_cast %12 : vector<4x128xf32> to vector<1x4x128xf32>
    %c0_6 = arith.constant 0 : index
    %c0_7 = arith.constant 0 : index
    %c0_8 = arith.constant 0 : index
    %14 = vector.load %arg4[%c0_6, %c0_7, %c0_8] : memref<1x4x128xf32, #tpu.memory_space<vmem>>, vector<1x4x128xf32>
    tpu.vector_store %arg4[%c0_6, %c0_7, %c0_8], %13 {strides = array<i32>} : memref<1x4x128xf32, #tpu.memory_space<vmem>>, vector<1x4x128xf32>,
    return
  }
  func.func @transform_0(%arg0: i32) -> (i32, i32) {
    %c0_i32 = arith.constant 0 : i32
    %c0_i32_0 = arith.constant 0 : i32
    return %c0_i32, %arg0 : i32, i32
  }
  func.func @transform_1(%arg0: i32) -> (i32, i32) {
    %c0_i32 = arith.constant 0 : i32
    %c0_i32_0 = arith.constant 0 : i32
    return %c0_i32, %arg0 : i32, i32
  }
  func.func @transform_2(%arg0: i32) -> (i32, i32) {
    %c0_i32 = arith.constant 0 : i32
    %c0_i32_0 = arith.constant 0 : i32
    return %arg0, %c0_i32 : i32, i32
  }
  func.func @transform_3(%arg0: i32) -> (i32, i32, i32) {
    %c0_i32 = arith.constant 0 : i32
    %c0_i32_0 = arith.constant 0 : i32
    %c0_i32_1 = arith.constant 0 : i32
    return %arg0, %c0_i32, %c0_i32_0 : i32, i32, i32
  }
}

</mosaic_0001>

<llo_original>
// kernel: memory_module_rsf_forward.1
$region0: #{memory_module_rsf_forward.1}
  #allocation0 [shape = 'u32[]', space=smem, size = 0x4, offset = 0x4, fixed_abs, tag = 'smem constant byte address 0x4 - core index']
  #allocation1 [shape = 'u32[144,128]{1,0:T(1,128)}', space=vmem, size = 0x12000, scoped, tag = 'internal scratch']
  %s0 = inlined_call_operand.vmem [shape: s32[1,1024], index: 0, kind: input, shape index: {}]
  %s1 = inlined_call_operand.vmem [shape: f32[1,1024], index: 1, kind: input, shape index: {}]
  %s2 = inlined_call_operand.hbm [shape: bf16[1024,128], index: 2, kind: input, shape index: {}]
  %s3 = inlined_call_operand.vmem [shape: f32[4,4,128], index: 3, kind: output, shape index: {}]
  %s4 = sld [smem:[#allocation0]]
  $region49: #{memory_module_rsf_forward.1} parent=0
    _
  %s6 = ssub.s32 1, %s4
  %s7 = scalar_select 0, %s6, %s4
  $region1: #{memory_module_rsf_forward.1} parent=0
    #allocation2 [shape = 'u8[131072]{0}', space=vmem, size = 0x20000, scoped, tag = 'input window, operand 2']
    #allocation3 [shape = 's32[2]{0}', space=sflag, size = 0x8, scoped, tag = 'scoped memory for memory_module_rsf_forward.1']
    %8 = vsyncpa [#allocation3], 0
    %s9 = scalar_lea.sflag [#allocation3], 1
    %10 = vsyncpa %s9, 0
    loop: start=0, step=1, limit=6
    $region2: #{memory_module_rsf_forward.1} parent=1 // loop_pre_header
      _
    $region3: #{memory_module_rsf_forward.1} parent=1 // loop_header
      %s12 = sphi 0, %s16
      %p13 = scmp.ge.s32.totalorder %s12, 6
      %s22 = sphi 0, %s24
      %s25 = sphi 0, %s22
      %s26 = sphi 0, %s25
      %s42 = sphi 0, %s26
      %s48 = sphi 0, %s50
      %s51 = sphi 0, %s48
      %s52 = sphi 0, %s51
      %s68 = sphi 0, %s52
      %s74 = sphi 0, %s76
      %s77 = sphi 0, %s74
      %s78 = sphi 0, %s77
      %s94 = sphi 0, %s78
      %s100 = sphi 0, %s102
      %s103 = sphi 0, %s100
      %s104 = sphi 0, %s103
      %s120 = sphi 0, %s104
    $region4: #{memory_module_rsf_forward.1} parent=1 // loop_header_branch
      %15 = sbr.rel (%p13) target = $region8
    $region5: #{memory_module_rsf_forward.1} parent=1 // loop_body
      %s17 = ssub.s32 %s12, 1
      %s18 = ssub.s32 %s12, 2
      %s19 = sadd.s32 %s12, 1
      %s20 = ssub.s32 %s12, %s19
      %p21 = scmp.eq.s32.totalorder %s20, 0
      %s23 = sadd.s32 %s22, 1
      %s24 = scalar_select %p21, %s22, %s23
      %p27 = pneg %p21
      %p28 = scmp.eq.s32.totalorder %s12, 3
      %p29 = por %p27, %p28
      %p30 = scmp.ne.s32.totalorder %s22, %s25
      %p31 = scmp.eq.s32.totalorder %s12, 0
      %p32 = por %p30, %p31
      %p33 = scmp.ne.s32.totalorder %s22, %s25
      %p34 = scmp.eq.s32.totalorder %s17, 3
      %p35 = por %p33, %p34
      %p36 = scmp.ne.s32.totalorder %s25, %s26
      %p37 = scmp.eq.s32.totalorder %s17, 0
      %p38 = por %p36, %p37
      %p39 = scmp.ne.s32.totalorder %s25, %s26
      %p40 = scmp.eq.s32.totalorder %s18, 3
      %p41 = por %p39, %p40
      %p43 = scmp.ne.s32.totalorder %s26, %s42
      %p44 = scmp.eq.s32.totalorder %s18, 0
      %p45 = por %p43, %p44
      %s46 = ssub.s32 %s12, %s19
      %p47 = scmp.eq.s32.totalorder %s46, 0
      %s49 = sadd.s32 %s48, 1
      %s50 = scalar_select %p47, %s48, %s49
      %p53 = pneg %p47
      %p54 = scmp.eq.s32.totalorder %s12, 3
      %p55 = por %p53, %p54
      %p56 = scmp.ne.s32.totalorder %s48, %s51
      %p57 = scmp.eq.s32.totalorder %s12, 0
      %p58 = por %p56, %p57
      %p59 = scmp.ne.s32.totalorder %s48, %s51
      %p60 = scmp.eq.s32.totalorder %s17, 3
      %p61 = por %p59, %p60
      %p62 = scmp.ne.s32.totalorder %s51, %s52
      %p63 = scmp.eq.s32.totalorder %s17, 0
      %p64 = por %p62, %p63
      %p65 = scmp.ne.s32.totalorder %s51, %s52
      %p66 = scmp.eq.s32.totalorder %s18, 3
      %p67 = por %p65, %p66
      %p69 = scmp.ne.s32.totalorder %s52, %s68
      %p70 = scmp.eq.s32.totalorder %s18, 0
      %p71 = por %p69, %p70
      %s72 = ssub.s32 %s12, %s19
      %p73 = scmp.eq.s32.totalorder %s72, 0
      %s75 = sadd.s32 %s74, 1
      %s76 = scalar_select %p73, %s74, %s75
      %p79 = pneg %p73
      %p80 = scmp.eq.s32.totalorder %s12, 3
      %p81 = por %p79, %p80
      %p82 = scmp.ne.s32.totalorder %s74, %s77
      %p83 = scmp.eq.s32.totalorder %s12, 0
      %p84 = por %p82, %p83
      %p85 = scmp.ne.s32.totalorder %s74, %s77
      %p86 = scmp.eq.s32.totalorder %s17, 3
      %p87 = por %p85, %p86
      %p88 = scmp.ne.s32.totalorder %s77, %s78
      %p89 = scmp.eq.s32.totalorder %s17, 0
      %p90 = por %p88, %p89
      %p91 = scmp.ne.s32.totalorder %s77, %s78
      %p92 = scmp.eq.s32.totalorder %s18, 3
      %p93 = por %p91, %p92
      %p95 = scmp.ne.s32.totalorder %s78, %s94
      %p96 = scmp.eq.s32.totalorder %s18, 0
      %p97 = por %p95, %p96
      %s98 = ssub.s32 %s12, %s19
      %p99 = scmp.eq.s32.totalorder %s98, 0
      %s101 = sadd.s32 %s100, 1
      %s102 = scalar_select %p99, %s100, %s101
      %p105 = pneg %p99
      %p106 = scmp.eq.s32.totalorder %s12, 3
      %p107 = por %p105, %p106
      %p108 = scmp.ne.s32.totalorder %s100, %s103
      %p109 = scmp.eq.s32.totalorder %s12, 0
      %p110 = por %p108, %p109
      %p111 = scmp.ne.s32.totalorder %s100, %s103
      %p112 = scmp.eq.s32.totalorder %s17, 3
      %p113 = por %p111, %p112
      %p114 = scmp.ne.s32.totalorder %s103, %s104
      %p115 = scmp.eq.s32.totalorder %s17, 0
      %p116 = por %p114, %p115
      %p117 = scmp.ne.s32.totalorder %s103, %s104
      %p118 = scmp.eq.s32.totalorder %s18, 3
      %p119 = por %p117, %p118
      %p121 = scmp.ne.s32.totalorder %s104, %s120
      %p122 = scmp.eq.s32.totalorder %s18, 0
      %p123 = por %p121, %p122
      %p124 = scmp.le.s32.totalorder 1, %s12
      %p125 = scmp.lt.s32.totalorder %s12, 5
      %p126 = pnand %p124, %p125
      %p127 = pneg %p126
      // Predicated region
      $region9: #{memory_module_rsf_forward.1} parent=5 // pred_check
        _
      $region10: #{memory_module_rsf_forward.1} parent=5 // pred_check_branch
        %129 = sbr.rel (%p126) target = $region12
      $region11: #{memory_module_rsf_forward.1} parent=5 // pred_region
        %s130 = ssub.s32 %s12, 1
      $region12: #{memory_module_rsf_forward.1} parent=5 // pred_fallthru
        _
      %p131 = scmp.lt.s32.totalorder %s12, 4
      // Predicated region
      $region13: #{memory_module_rsf_forward.1} parent=5 // pred_check
        %p132 = pneg %p131
      $region14: #{memory_module_rsf_forward.1} parent=5 // pred_check_branch
        %134 = sbr.rel (%p132) target = $region16
      $region15: #{memory_module_rsf_forward.1} parent=5 // pred_region
        // Predicated region
        $region17: #{memory_module_rsf_forward.1} parent=15 // pred_check
          %p135 = pneg %p32
        $region18: #{memory_module_rsf_forward.1} parent=15 // pred_check_branch
          %137 = sbr.rel (%p135) target = $region20
        $region19: #{memory_module_rsf_forward.1} parent=15 // pred_region
          %s138 = smul.u32 2, %s12
          %p139 = scmp.lt.s32.totalorder %s138, 7
          %s140 = scalar_select %p139, %s138, 7
          %s141 = scalar_lea.vmem %s0, %s140
          %s142 = smul.u32 2, %s12
        $region20: #{memory_module_rsf_forward.1} parent=15 // pred_fallthru
          _
        // Predicated region
        $region21: #{memory_module_rsf_forward.1} parent=15 // pred_check
          %p143 = pneg %p58
        $region22: #{memory_module_rsf_forward.1} parent=15 // pred_check_branch
          %145 = sbr.rel (%p143) target = $region24
        $region23: #{memory_module_rsf_forward.1} parent=15 // pred_region
          %s146 = smul.u32 2, %s12
          %p147 = scmp.lt.s32.totalorder %s146, 7
          %s148 = scalar_select %p147, %s146, 7
          %s149 = scalar_lea.vmem %s1, %s148
          %s150 = smul.u32 2, %s12
        $region24: #{memory_module_rsf_forward.1} parent=15 // pred_fallthru
          _
        // Predicated region
        $region25: #{memory_module_rsf_forward.1} parent=15 // pred_check
          %p151 = pneg %p84
        $region26: #{memory_module_rsf_forward.1} parent=15 // pred_check_branch
          %153 = sbr.rel (%p151) target = $region28
        $region27: #{memory_module_rsf_forward.1} parent=15 // pred_region
          %s154 = sand.u32 %s74, 1
          %s155 = scalar_lea.sflag [#allocation3], %s154
          %s156 = sand.u32 %s74, 1
          %s157 = smul.addr %s156, 128
          %s158 = scalar_lea.vmem [#allocation2], %s157
          %s159 = smul.u32 32, %s12
          %s161 = ssub.s32 2048, 2048
          %162 = vsyncadd %s155, %s161
          %s163 = smul.addr %s159, 64
          %s164 = scalar_lea.hbm %s2, %s163
          %s165 = sshll.u32 %s158, 4
          %s166 = int_to_ptr.vmem [resolvable:$true] %s165
          %171 = dma.hbm_to_vmem [thread:$0]  %s164, 2048, %s166, %s155, 64, 64, 4
        $region28: #{memory_module_rsf_forward.1} parent=15 // pred_fallthru
          _
      $region16: #{memory_module_rsf_forward.1} parent=5 // pred_fallthru
        _
      %p172 = scmp.le.s32.totalorder 1, %s12
      %p173 = scmp.lt.s32.totalorder %s12, 5
      %p174 = pnand %p172, %p173
      %p175 = pneg %p174
      // Predicated region
      $region29: #{memory_module_rsf_forward.1} parent=5 // pred_check
        _
      $region30: #{memory_module_rsf_forward.1} parent=5 // pred_check_branch
        %177 = sbr.rel (%p174) target = $region32
      $region31: #{memory_module_rsf_forward.1} parent=5 // pred_region
        %s178 = ssub.s32 %s12, 1
        %s179 = sand.u32 %s77, 1
        %s180 = scalar_lea.sflag [#allocation3], %s179
        %s181 = sand.u32 %s77, 1
        %s182 = smul.addr %s181, 128
        %s183 = scalar_lea.vmem [#allocation2], %s182
        // Predicated region
        $region33: #{memory_module_rsf_forward.1} parent=31 // pred_check
          %p184 = pneg %p90
        $region34: #{memory_module_rsf_forward.1} parent=31 // pred_check_branch
          %186 = sbr.rel (%p184) target = $region36
        $region35: #{memory_module_rsf_forward.1} parent=31 // pred_region
          %187 = dma.done %s180, 2048
        $region36: #{memory_module_rsf_forward.1} parent=31 // pred_fallthru
          _
        %s188 = smul.u32 2, %s17
        %p189 = scmp.lt.s32.totalorder %s188, 7
        %s190 = scalar_select %p189, %s188, 7
        %s191 = scalar_lea.vmem %s0, %s190
        %p192 = pneg %p38
        %p193 = pneg %p35
        %s194 = smul.u32 2, %s17
        %p195 = scmp.lt.s32.totalorder %s194, 7
        %s196 = scalar_select %p195, %s194, 7
        %s197 = scalar_lea.vmem %s1, %s196
        %p198 = pneg %p64
        %p199 = pneg %p61
        %s200 = sand.u32 %s77, 1
        %s201 = scalar_lea.sflag [#allocation3], %s200
        %s202 = sand.u32 %s77, 1
        %s203 = smul.addr %s202, 128
        %s204 = scalar_lea.vmem [#allocation2], %s203
        %p205 = pneg %p90
        %p206 = pneg %p87
        %p207 = pneg %p116
        %p208 = pneg %p113
        %p209 = scmp.lt.s32.totalorder %s17, 3
        %s210 = scalar_select %p209, %s17, 3
        %s211 = smul.addr %s210, 4
        %s212 = scalar_lea.vmem %s3, %s211
        %s213 = smul.u32 2, %s17
        %p214 = scmp.lt.s32.totalorder %s213, 7
        %s215 = scalar_select %p214, %s213, 7
        %s216 = scalar_lea.vmem %s0, %s215
        %s217 = smul.u32 2, %s17
        %s218 = smul.u32 2, %s17
        %p219 = scmp.lt.s32.totalorder %s218, 7
        %s220 = scalar_select %p219, %s218, 7
        %s221 = scalar_lea.vmem %s1, %s220
        %s222 = smul.u32 2, %s17
        %s223 = smul.u32 32, %s17
        %p224 = scmp.lt.s32.totalorder %s17, 3
        %s225 = scalar_select %p224, %s17, 3
        %s226 = smul.addr %s225, 4
        %s227 = scalar_lea.vmem %s3, %s226
        %v229 = vld [vmem:[%s216] sm:$0x3]
        %v230 = vld [vmem:[%s221] sm:$0x3]
        %v231 = vlaneseq
        %v232 = vshrl.u32 %v231, 7
        %v233 = vlaneseq
        %v234 = vshrl.u32 %v233, 7
        %v235 = vsub.s32 0, %v234
        %v236 = vrot.slane %v229, %v235
        %v237 = vlaneseq
        %v238 = vshrl.u32 %v237, 7
        %v239 = vsub.s32 1, %v238
        %v240 = vrot.slane %v229, %v239
        %vm241 = vcmp.eq.s32.totalorder %v236, %v232
        %vm242 = vcmp.eq.s32.totalorder %v240, %v232
        %v244 = vlaneseq
        %v245 = vshrl.u32 %v244, 7
        %v246 = vsub.s32 0, %v245
        %v247 = vrot.slane %v230, %v246
        %v248 = vlaneseq
        %v249 = vshrl.u32 %v248, 7
        %v250 = vsub.s32 1, %v249
        %v251 = vrot.slane %v230, %v250
        %v254 = vsel %vm241, %v247, 0.0
        %v255 = vsel %vm242, %v251, 0.0
        %v256 = vpack.c.bf16 %v254, %v254
        %v257 = vpack.c.bf16 %v255, %v255
        %v258 = vld [vmem:[%s183] sm:$0xf]
        %v259 = vld [vmem:[%s183 + $0x4] sm:$0xf]
        %v260 = vld [vmem:[%s183 + $0x8] sm:$0xf]
        %v261 = vld [vmem:[%s183 + $0xc] sm:$0xf]
        %v262 = vld [vmem:[%s183 + $0x10] sm:$0xf]
        %v263 = vld [vmem:[%s183 + $0x14] sm:$0xf]
        %v264 = vld [vmem:[%s183 + $0x18] sm:$0xf]
        %v265 = vld [vmem:[%s183 + $0x1c] sm:$0xf]
        %v266 = vld [vmem:[%s183 + $0x20] sm:$0xf]
        %v267 = vld [vmem:[%s183 + $0x24] sm:$0xf]
        %v268 = vld [vmem:[%s183 + $0x28] sm:$0xf]
        %v269 = vld [vmem:[%s183 + $0x2c] sm:$0xf]
        %v270 = vld [vmem:[%s183 + $0x30] sm:$0xf]
        %v271 = vld [vmem:[%s183 + $0x34] sm:$0xf]
        %v272 = vld [vmem:[%s183 + $0x38] sm:$0xf]
        %v273 = vld [vmem:[%s183 + $0x3c] sm:$0xf]
        %v274 = vld [vmem:[%s183 + $0x40] sm:$0xf]
        %v275 = vld [vmem:[%s183 + $0x44] sm:$0xf]
        %v276 = vld [vmem:[%s183 + $0x48] sm:$0xf]
        %v277 = vld [vmem:[%s183 + $0x4c] sm:$0xf]
        %v278 = vld [vmem:[%s183 + $0x50] sm:$0xf]
        %v279 = vld [vmem:[%s183 + $0x54] sm:$0xf]
        %v280 = vld [vmem:[%s183 + $0x58] sm:$0xf]
        %v281 = vld [vmem:[%s183 + $0x5c] sm:$0xf]
        %v282 = vld [vmem:[%s183 + $0x60] sm:$0xf]
        %v283 = vld [vmem:[%s183 + $0x64] sm:$0xf]
        %v284 = vld [vmem:[%s183 + $0x68] sm:$0xf]
        %v285 = vld [vmem:[%s183 + $0x6c] sm:$0xf]
        %v286 = vld [vmem:[%s183 + $0x70] sm:$0xf]
        %v287 = vld [vmem:[%s183 + $0x74] sm:$0xf]
        %v288 = vld [vmem:[%s183 + $0x78] sm:$0xf]
        %v289 = vld [vmem:[%s183 + $0x7c] sm:$0xf]
        %v322 = vunpack.c.l.b16 %v258
        %v323 = vunpack.c.l.b16 %v259
        %v324 = vunpack.c.l.b16 %v260
        %v325 = vunpack.c.l.b16 %v261
        %v326 = vunpack.c.l.b16 %v262
        %v327 = vunpack.c.l.b16 %v263
        %v328 = vunpack.c.l.b16 %v264
        %v329 = vunpack.c.l.b16 %v265
        %v330 = vunpack.c.l.b16 %v266
        %v331 = vunpack.c.l.b16 %v267
        %v332 = vunpack.c.l.b16 %v268
        %v333 = vunpack.c.l.b16 %v269
        %v334 = vunpack.c.l.b16 %v270
        %v335 = vunpack.c.l.b16 %v271
        %v336 = vunpack.c.l.b16 %v272
        %v337 = vunpack.c.l.b16 %v273
        %v338 = vunpack.c.l.b16 %v274
        %v339 = vunpack.c.l.b16 %v275
        %v340 = vunpack.c.l.b16 %v276
        %v341 = vunpack.c.l.b16 %v277
        %v342 = vunpack.c.l.b16 %v278
        %v343 = vunpack.c.l.b16 %v279
        %v344 = vunpack.c.l.b16 %v280
        %v345 = vunpack.c.l.b16 %v281
        %v346 = vunpack.c.l.b16 %v282
        %v347 = vunpack.c.l.b16 %v283
        %v348 = vunpack.c.l.b16 %v284
        %v349 = vunpack.c.l.b16 %v285
        %v350 = vunpack.c.l.b16 %v286
        %v351 = vunpack.c.l.b16 %v287
        %v352 = vunpack.c.l.b16 %v288
        %v353 = vunpack.c.l.b16 %v289
        %v354 = vpack.c.b16 %v323, %v322
        %v355 = vpack.c.b16 %v325, %v324
        %v356 = vpack.c.b16 %v327, %v326
        %v357 = vpack.c.b16 %v329, %v328
        %v358 = vpack.c.b16 %v331, %v330
        %v359 = vpack.c.b16 %v333, %v332
        %v360 = vpack.c.b16 %v335, %v334
        %v361 = vpack.c.b16 %v337, %v336
        %v362 = vpack.c.b16 %v339, %v338
        %v363 = vpack.c.b16 %v341, %v340
        %v364 = vpack.c.b16 %v343, %v342
        %v365 = vpack.c.b16 %v345, %v344
        %v366 = vpack.c.b16 %v347, %v346
        %v367 = vpack.c.b16 %v349, %v348
        %v368 = vpack.c.b16 %v351, %v350
        %v369 = vpack.c.b16 %v353, %v352
        %386 = vmatprep.subr.bf16.mxu0 0
        %387 = vmatpush1.bf16.msra.mxu0 %v361
        %388 = vmatprep.subr.bf16.mxu0 0
        %389 = vmatpush1.bf16.msra.mxu0 %v360
        %390 = vmatprep.subr.bf16.mxu0 0
        %391 = vmatpush1.bf16.msra.mxu0 %v359
        %392 = vmatprep.subr.bf16.mxu0 0
        %393 = vmatpush1.bf16.msra.mxu0 %v358
        %394 = vmatprep.subr.bf16.mxu0 0
        %395 = vmatpush1.bf16.msra.mxu0 %v357
        %396 = vmatprep.subr.bf16.mxu0 0
        %397 = vmatpush1.bf16.msra.mxu0 %v356
        %398 = vmatprep.subr.bf16.mxu0 0
        %399 = vmatpush1.bf16.msra.mxu0 %v355
        %400 = vmatprep.subr.bf16.mxu0 0
        %401 = vmatpush1.bf16.msra.mxu0 %v354
        %402 = vmatprep.subr.bf16.mxu0 0
        %403 = vmatpush2.bf16.msra.mxu0 %v369
        %404 = vmatprep.subr.bf16.mxu0 0
        %405 = vmatpush2.bf16.msra.mxu0 %v368
        %406 = vmatprep.subr.bf16.mxu0 0
        %407 = vmatpush2.bf16.msra.mxu0 %v367
        %408 = vmatprep.subr.bf16.mxu0 0
        %409 = vmatpush2.bf16.msra.mxu0 %v366
        %410 = vmatprep.subr.bf16.mxu0 0
        %411 = vmatpush2.bf16.msra.mxu0 %v365
        %412 = vmatprep.subr.bf16.mxu0 0
        %413 = vmatpush2.bf16.msra.mxu0 %v364
        %414 = vmatprep.subr.bf16.mxu0 0
        %415 = vmatpush2.bf16.msra.mxu0 %v363
        %416 = vmatprep.subr.bf16.mxu0 0
        %417 = vmatpush2.bf16.msra.mxu0 %v362
        %418 = vmatprep.mubr.bf16.mxu0 %v257
        %419 = vmatmul.mubr.bf16.gmra.mxu0 %v256
        %v420 = vpop.f32.mrf.mxu0
        %v421 = vadd.f32 0.0, %v420
        %v422 = vpop.f32.mrf.mxu0
        %v423 = vpop.f32.mrf.mxu0
        %v424 = vpop.f32.mrf.mxu0
        %425 = vdwg.mxu0
        %426 = vst [vmem:[%s227] sm:$0xf] %v421
        %p427 = scmp.lt.s32.totalorder %s17, 3
        %s428 = scalar_select %p427, %s17, 3
        %s429 = smul.addr %s428, 4
        %s430 = scalar_lea.vmem %s3, %s429
        // Predicated region
        $region37: #{memory_module_rsf_forward.1} parent=31 // pred_check
          %p431 = pneg %p113
        $region38: #{memory_module_rsf_forward.1} parent=31 // pred_check_branch
          %433 = sbr.rel (%p431) target = $region40
        $region39: #{memory_module_rsf_forward.1} parent=31 // pred_region
          _
        $region40: #{memory_module_rsf_forward.1} parent=31 // pred_fallthru
          _
      $region32: #{memory_module_rsf_forward.1} parent=5 // pred_fallthru
        _
      %p434 = scmp.le.s32.totalorder 2, %s12
      // Predicated region
      $region41: #{memory_module_rsf_forward.1} parent=5 // pred_check
        %p435 = pneg %p434
      $region42: #{memory_module_rsf_forward.1} parent=5 // pred_check_branch
        %437 = sbr.rel (%p435) target = $region44
      $region43: #{memory_module_rsf_forward.1} parent=5 // pred_region
        %s438 = ssub.s32 %s12, 2
        // Predicated region
        $region45: #{memory_module_rsf_forward.1} parent=43 // pred_check
          %p439 = pneg %p119
        $region46: #{memory_module_rsf_forward.1} parent=43 // pred_check_branch
          %441 = sbr.rel (%p439) target = $region48
        $region47: #{memory_module_rsf_forward.1} parent=43 // pred_region
          %p442 = scmp.lt.s32.totalorder %s18, 3
          %s443 = scalar_select %p442, %s18, 3
          %s444 = smul.addr %s443, 4
          %s445 = scalar_lea.vmem %s3, %s444
        $region48: #{memory_module_rsf_forward.1} parent=43 // pred_fallthru
          _
      $region44: #{memory_module_rsf_forward.1} parent=5 // pred_fallthru
        _
    $region6: #{memory_module_rsf_forward.1} parent=1 // loop_footer
      %s16 = sadd.s32 1, %s12
    $region7: #{memory_module_rsf_forward.1} parent=1 // loop_footer_branch
      %11 = sbr.rel target = $region3
    $region8: #{memory_module_rsf_forward.1} parent=1 // loop_exit
      _
    %446 = vsyncpa [#allocation3], 1
    %s447 = scalar_lea.sflag [#allocation3], 1
    %448 = vsyncpa %s447, 1

</llo_original>
